<compile_context>
chip_gen: v7x
topology: tpu7x:2x2x1
jax: 0.10.0
libtpu: 0.0.40
codegen_flags: <defaults>
</compile_context>

<pallas_src>
from functools import partial

import jax
import jax.numpy as jnp
from jax.experimental import pallas as pl
from jax.experimental.pallas import tpu as pltpu

LANES = 128  # vreg lane width (fast axis)

# Per-input block size (bytes) by TPU generation; chosen so that
# 3 arrays x 2 buffers x block fits the scoped-VMEM budget of each chip.
_BLOCK_BYTES = {"v5": 2 << 20, "v6": 8 << 20, "v7": 4 << 20}
_DEFAULT_BLOCK_BYTES = 2 << 20
_VMEM_LIMIT_BYTES = {"v6": 64 << 20}  # 6 x 8 MiB > 32 MiB default scoped limit


def _tpu_generation():
    """Best-effort TPU generation tag ('v5' / 'v6' / 'v7') or None."""
    try:
        kind = jax.devices()[0].device_kind.lower()
    except Exception:  # pragma: no cover - non-TPU / odd backends
        return None
    for tag in ("v7", "v6", "v5"):
        if tag in kind:
            return tag
    return None


def _sublane_packing(dtype) -> int:
    """Rows per packed vreg tile: 8 for 4-byte, 16 for 2-byte, 32 for 1-byte."""
    itemsize = dtype.itemsize
    if itemsize >= 4:
        return 8
    return 8 * (4 // itemsize)


def _add_kernel(x_ref, y_ref, o_ref):
    # Pure elementwise VPU add on a lane-dense (block_rows, 128) tile.
    o_ref[...] = x_ref[...] + y_ref[...]


@partial(jax.jit, static_argnames=("inplace", "block_bytes"))
def pallas_add(x, y, *, inplace: bool = False, block_bytes: int | None = None):
    """Elementwise x + y via a Pallas TPU kernel (forward of `Add`)."""
    assert x.shape == y.shape, "Add requires matching shapes"
    assert x.dtype == y.dtype, "Add requires matching dtypes"
    orig_shape = x.shape
    n = x.size

    # Ragged totals (n not a multiple of the 128-lane width) would require a
    # wrapper-side pad (copies both inputs -> ~3x the ideal HBM traffic) or an
    # in-kernel masked 1-D tail.  A fused XLA add already achieves the 3n-byte
    # roofline for this memory-bound op, so fall back for that rare case.
    # TODO(synk): in-kernel masked-tail variant to keep ragged totals in Pallas.
    if n == 0 or n % LANES != 0:
        return x + y

    dtype = x.dtype
    itemsize = dtype.itemsize
    packing = _sublane_packing(dtype)
    rows = n // LANES
    gen = _tpu_generation()

    # Per-generation block sizing, rounded down to whole packed vreg tiles.
    target_bytes = block_bytes if block_bytes is not None else _BLOCK_BYTES.get(
        gen, _DEFAULT_BLOCK_BYTES
    )
    target_rows = max(packing, (target_bytes // (LANES * itemsize)) // packing * packing)
    block_rows = rows if rows <= target_rows else target_rows

    # v7x has 2 TensorCores per chip: make sure the grid has >= 2 steps so both
    # cores get work, then mark the axis CORE_PARALLEL ("parallel" alone does
    # not change codegen).
    if gen == "v7" and rows > packing:
        half = -(-rows // 2)                     # ceil(rows / 2)
        half = -(-half // packing) * packing     # round up to packed tile
        block_rows = min(block_rows, half)

    num_blocks = pl.cdiv(rows, block_rows)

    if gen == "v7" and num_blocks >= 2:
        dim_sem = (pltpu.CORE_PARALLEL,)
    else:
        dim_sem = ("arbitrary",)

    cp_kwargs = {"dimension_semantics": dim_sem}
    vmem_limit = _VMEM_LIMIT_BYTES.get(gen)
    if vmem_limit is not None:
        cp_kwargs["vmem_limit_bytes"] = vmem_limit

    call_kwargs = {}
    if inplace:
        # Reuse x's buffer for the output (P8); mirrors torch's add_ intent.
        call_kwargs["input_output_aliases"] = {0: 0}

    # Bitcast reshapes of contiguous arrays: no data movement.
    x2 = x.reshape(rows, LANES)
    y2 = y.reshape(rows, LANES)

    out2 = pl.pallas_call(
        _add_kernel,
        out_shape=jax.ShapeDtypeStruct((rows, LANES), dtype),
        grid=(num_blocks,),
        in_specs=[
            pl.BlockSpec((block_rows, LANES), lambda i: (i, 0)),
            pl.BlockSpec((block_rows, LANES), lambda i: (i, 0)),
        ],
        out_specs=pl.BlockSpec((block_rows, LANES), lambda i: (i, 0)),
        compiler_params=pltpu.CompilerParams(**cp_kwargs),
        **call_kwargs,
    )(x2, y2)

    return out2.reshape(orig_shape)


if __name__ == "__main__":
    key = jax.random.PRNGKey(0)
    k1, k2, k3, k4, k5, k6, k7, k8 = jax.random.split(key, 8)

    # Residual-add shapes consistent with an ensemble MLP:
    # (batch=2, channels=4, spatial=16x16).
    shape = (2, 4, 16, 16)
    x = jax.random.normal(k1, shape, jnp.float32)
    y = jax.random.normal(k2, shape, jnp.float32)

    out = jax.block_until_ready(pallas_add(x, y))
    ref = x + y
    assert out.shape == shape and out.dtype == x.dtype, "shape/dtype mismatch"
    assert jnp.allclose(out, ref, atol=1e-6, rtol=1e-6), "output mismatch"

    # In-place flavor (buffer aliasing inside the pallas_call).
    out_ip = jax.block_until_ready(pallas_add(x, y, inplace=True))
    assert jnp.allclose(out_ip, ref, atol=1e-6, rtol=1e-6), "inplace mismatch"

    # 128-aligned but not a whole vreg-tile row count (12 rows, single block).
    a = jax.random.normal(k3, (2, 8, 96), jnp.float32)
    b = jax.random.normal(k4, (2, 8, 96), jnp.float32)
    assert jnp.allclose(
        jax.block_until_ready(pallas_add(a, b)), a + b, atol=1e-6, rtol=1e-6
    ), "secondary-shape mismatch"

    # Multi-block grid with a partial last block (small block_bytes override).
    c = jax.random.normal(k5, (2304, 128), jnp.float32)
    d = jax.random.normal(k6, (2304, 128), jnp.float32)
    assert jnp.allclose(
        jax.block_until_ready(pallas_add(c, d, block_bytes=1 << 20)),
        c + d, atol=1e-6, rtol=1e-6,
    ), "multi-block mismatch"

    # bf16 exercises dtype-aware sublane packing (16 rows per vreg tile).
    e = jax.random.normal(k7, (4, 8, 128), jnp.bfloat16)
    f = jax.random.normal(k8, (4, 8, 128), jnp.bfloat16)
    assert jnp.allclose(
        jax.block_until_ready(pallas_add(e, f)).astype(jnp.float32),
        (e + f).astype(jnp.float32), atol=1e-2, rtol=1e-2,
    ), "bf16 mismatch"

    # Ragged total (not a multiple of 128 lanes) -> bandwidth-optimal fallback.
    g = jax.random.normal(k1, (3, 5, 7), jnp.float32)
    h = jax.random.normal(k2, (3, 5, 7), jnp.float32)
    assert jnp.allclose(
        jax.block_until_ready(pallas_add(g, h)), g + h, atol=1e-6, rtol=1e-6
    ), "ragged-fallback mismatch"

    print("KERNEL_OK")
</pallas_src>

<mosaic_0001>
module attributes {stable_mosaic.version = 11 : i64} {
  func.func @_add_kernel(%arg0: i32, %arg1: memref<16x128xf32, #tpu.memory_space<vmem>>, %arg2: memref<16x128xf32, #tpu.memory_space<vmem>>, %arg3: memref<16x128xf32, #tpu.memory_space<vmem>>) attributes {dimension_semantics = [#tpu.dimension_semantics<arbitrary>], iteration_bounds = array<i64: 1>, scalar_prefetch = 0 : i64, scratch_operands = 0 : i64, tpu.core_type = #tpu.core_type<tc>, window_params = [{transform_indices = @transform_0, window_bounds = array<i64: 16, 128>}, {transform_indices = @transform_1, window_bounds = array<i64: 16, 128>}, {transform_indices = @transform_2, window_bounds = array<i64: 16, 128>}]} {
    %c0 = arith.constant 0 : index
    %c0_0 = arith.constant 0 : index
    %0 = vector.load %arg1[%c0, %c0_0] : memref<16x128xf32, #tpu.memory_space<vmem>>, vector<16x128xf32>
    %c0_1 = arith.constant 0 : index
    %c0_2 = arith.constant 0 : index
    %1 = vector.load %arg2[%c0_1, %c0_2] : memref<16x128xf32, #tpu.memory_space<vmem>>, vector<16x128xf32>
    %2 = arith.addf %0, %1 : vector<16x128xf32>
    %c0_3 = arith.constant 0 : index
    %c0_4 = arith.constant 0 : index
    %3 = vector.load %arg3[%c0_3, %c0_4] : memref<16x128xf32, #tpu.memory_space<vmem>>, vector<16x128xf32>
    tpu.vector_store %arg3[%c0_3, %c0_4], %2 {strides = array<i32>} : memref<16x128xf32, #tpu.memory_space<vmem>>, vector<16x128xf32>,
    return
  }
  func.func @transform_0(%arg0: i32) -> (i32, i32) {
    %c0_i32 = arith.constant 0 : i32
    %c0_i32_0 = arith.constant 0 : i32
    return %arg0, %c0_i32 : i32, i32
  }
  func.func @transform_1(%arg0: i32) -> (i32, i32) {
    %c0_i32 = arith.constant 0 : i32
    %c0_i32_0 = arith.constant 0 : i32
    return %arg0, %c0_i32 : i32, i32
  }
  func.func @transform_2(%arg0: i32) -> (i32, i32) {
    %c0_i32 = arith.constant 0 : i32
    %c0_i32_0 = arith.constant 0 : i32
    return %arg0, %c0_i32 : i32, i32
  }
}

</mosaic_0001>

<llo_original>
// kernel: pallas_add.1
$region0: #{pallas_add.1}
  #allocation0 [shape = 'u32[]', space=smem, size = 0x4, offset = 0x4, fixed_abs, tag = 'smem constant byte address 0x4 - core index']
  #allocation1 [shape = 'u32[144,128]{1,0:T(1,128)}', space=vmem, size = 0x12000, scoped, tag = 'internal scratch']
  %s0 = inlined_call_operand.vmem [shape: f32[16,128], index: 0, kind: input, shape index: {}]
  %s1 = inlined_call_operand.vmem [shape: f32[16,128], index: 1, kind: input, shape index: {}]
  %s2 = inlined_call_operand.vmem [shape: f32[16,128], index: 2, kind: output, shape index: {}]
  %s3 = sld [smem:[#allocation0]]
  $region18: #{pallas_add.1} parent=0
    _
  %s5 = ssub.s32 1, %s3
  %s6 = scalar_select 0, %s5, %s3
  // Predicated region
  $region2: #{pallas_add.1} parent=0 // pred_check
    _
  $region3: #{pallas_add.1} parent=0 // pred_check_branch
    %8 = sbr.rel (0) target = $region5
  $region4: #{pallas_add.1} parent=0 // pred_region
    _
  $region5: #{pallas_add.1} parent=0 // pred_fallthru
    _
  // Predicated region
  $region6: #{pallas_add.1} parent=0 // pred_check
    _
  $region7: #{pallas_add.1} parent=0 // pred_check_branch
    %10 = sbr.rel (0) target = $region9
  $region8: #{pallas_add.1} parent=0 // pred_region
    _
  $region9: #{pallas_add.1} parent=0 // pred_fallthru
    _
  %v11 = vld [vmem:[%s0] sm:$0xff]
  %v12 = vld [vmem:[%s0 + $0x8] sm:$0xff]
  %v13 = vld [vmem:[%s1] sm:$0xff]
  %v14 = vld [vmem:[%s1 + $0x8] sm:$0xff]
  %v15 = vadd.f32 %v11, %v13
  %v16 = vadd.f32 %v12, %v14
  %17 = vst [vmem:[%s2] sm:$0xff] %v15
  %18 = vst [vmem:[%s2 + $0x8] sm:$0xff] %v16
  // Predicated region
  $region10: #{pallas_add.1} parent=0 // pred_check
    _
  $region11: #{pallas_add.1} parent=0 // pred_check_branch
    %20 = sbr.rel (0) target = $region13
  $region12: #{pallas_add.1} parent=0 // pred_region
    _
  $region13: #{pallas_add.1} parent=0 // pred_fallthru
    _
  // Predicated region
  $region14: #{pallas_add.1} parent=0 // pred_check
    _
  $region15: #{pallas_add.1} parent=0 // pred_check_branch
    %22 = sbr.rel (0) target = $region17
  $region16: #{pallas_add.1} parent=0 // pred_region
    _
  $region17: #{pallas_add.1} parent=0 // pred_fallthru
    _

</llo_original>
